<compile_context>
chip_gen: v7x
topology: tpu7x:2x2x1
jax: 0.10.0
libtpu: 0.0.40
codegen_flags: <defaults>
</compile_context>

<pallas_src>
import functools

import jax
import jax.numpy as jnp
from jax.experimental import pallas as pl
from jax.experimental.pallas import tpu as pltpu

HIDDEN = 256


def actor_kernel(x_ref, w1_ref, b1_ref, w2_ref, b2_ref, w3_ref, b3_ref,
                 scale_ref, bias_ref, o_ref):
    # fc1 + relu   (bf16 operands -> MXU, f32 accumulate)
    h1 = jnp.dot(x_ref[...], w1_ref[...], preferred_element_type=jnp.float32)
    h1 = jnp.maximum(h1 + b1_ref[...], 0.0)
    # fc2 + relu
    h2 = jnp.dot(h1.astype(jnp.bfloat16), w2_ref[...],
                 preferred_element_type=jnp.float32)
    h2 = jnp.maximum(h2 + b2_ref[...], 0.0)
    # fc_mu + tanh
    mu = jnp.dot(h2.astype(jnp.bfloat16), w3_ref[...],
                 preferred_element_type=jnp.float32)
    mu = jnp.tanh(mu + b3_ref[...])
    # action rescaling: mu * action_scale + action_bias  (f32 VPU)
    o_ref[...] = mu * scale_ref[...] + bias_ref[...]


@functools.partial(jax.jit, static_argnames=("block_b",))
def simple_actor_forward(x, params, *, block_b=256):
    """x: (B, obs_dim) float32 -> (B, action_dim) float32."""
    w1, b1, w2, b2, w3, b3, action_scale, action_bias = params
    B, obs_dim = x.shape
    hidden = w1.shape[1]
    action_dim = w3.shape[1]

    # bf16 operands for the MXU; biases / scale / bias stay f32.
    x_bf = x.astype(jnp.bfloat16)
    w1_bf = w1.astype(jnp.bfloat16)
    w2_bf = w2.astype(jnp.bfloat16)
    w3_bf = w3.astype(jnp.bfloat16)

    # Batch tile: full batch if it fits in one tile, otherwise tiles of
    # block_b rows (multiple of 8) with zero-padding on the tail tile.
    if B <= block_b:
        tb = B
        b_pad = B
    else:
        tb = block_b
        b_pad = pl.cdiv(B, tb) * tb
        if b_pad != B:
            x_bf = jnp.pad(x_bf, ((0, b_pad - B), (0, 0)))
    grid = (b_pad // tb,)

    resident = lambda i: (0, 0)     # weights/biases pinned in VMEM across steps
    batched = lambda i: (i, 0)      # x / out tiled along the batch axis

    flops = 2 * b_pad * (obs_dim * hidden + hidden * hidden + hidden * action_dim)
    bytes_accessed = (
        x_bf.size * 2 + w1_bf.size * 2 + w2_bf.size * 2 + w3_bf.size * 2
        + (b1.size + b2.size + b3.size + action_scale.size + action_bias.size) * 4
        + b_pad * action_dim * 4)

    out = pl.pallas_call(
        actor_kernel,
        out_shape=jax.ShapeDtypeStruct((b_pad, action_dim), jnp.float32),
        grid=grid,
        in_specs=[
            pl.BlockSpec((tb, obs_dim), batched),            # x
            pl.BlockSpec((obs_dim, hidden), resident),       # w1
            pl.BlockSpec((1, hidden), resident),             # b1
            pl.BlockSpec((hidden, hidden), resident),        # w2
            pl.BlockSpec((1, hidden), resident),             # b2
            pl.BlockSpec((hidden, action_dim), resident),    # w3
            pl.BlockSpec((1, action_dim), resident),         # b3
            pl.BlockSpec((1, action_dim), resident),         # action_scale
            pl.BlockSpec((1, action_dim), resident),         # action_bias
        ],
        out_specs=pl.BlockSpec((tb, action_dim), batched),
        compiler_params=pltpu.CompilerParams(
            dimension_semantics=("parallel",)),
        cost_estimate=pl.CostEstimate(
            flops=flops,
            transcendentals=b_pad * action_dim,
            bytes_accessed=bytes_accessed),
    )(x_bf, w1_bf, b1, w2_bf, b2, w3_bf, b3, action_scale, action_bias)

    return out[:B] if b_pad != B else out


def init_params(key, observation_dim, action_dim, u_max, u_min):
    """Deterministic init mimicking nn.Linear defaults (U[-1/sqrt(fan_in), +])."""
    ks = jax.random.split(key, 6)

    def linear(kw, kb, fan_in, fan_out):
        bound = 1.0 / jnp.sqrt(fan_in)
        w = jax.random.uniform(kw, (fan_in, fan_out), jnp.float32, -bound, bound)
        b = jax.random.uniform(kb, (1, fan_out), jnp.float32, -bound, bound)
        return w, b

    w1, b1 = linear(ks[0], ks[1], observation_dim, HIDDEN)
    w2, b2 = linear(ks[2], ks[3], HIDDEN, HIDDEN)
    w3, b3 = linear(ks[4], ks[5], HIDDEN, action_dim)

    u_max = jnp.asarray(u_max, jnp.float32).reshape(1, action_dim)
    u_min = jnp.asarray(u_min, jnp.float32).reshape(1, action_dim)
    action_scale = (u_max - u_min) / 2.0   # registered buffer
    action_bias = (u_max + u_min) / 2.0    # registered buffer
    return (w1, b1, w2, b2, w3, b3, action_scale, action_bias)


def reference_forward_f32(x, params):
    w1, b1, w2, b2, w3, b3, action_scale, action_bias = params
    h = jnp.maximum(x @ w1 + b1, 0.0)
    h = jnp.maximum(h @ w2 + b2, 0.0)
    mu = jnp.tanh(h @ w3 + b3)
    return mu * action_scale + action_bias


def reference_forward_bf16(x, params):
    """Same bf16-weight / f32-accumulate precision path as the kernel."""
    w1, b1, w2, b2, w3, b3, action_scale, action_bias = params
    bf = jnp.bfloat16
    h = jnp.dot(x.astype(bf), w1.astype(bf), preferred_element_type=jnp.float32)
    h = jnp.maximum(h + b1, 0.0)
    h = jnp.dot(h.astype(bf), w2.astype(bf), preferred_element_type=jnp.float32)
    h = jnp.maximum(h + b2, 0.0)
    mu = jnp.dot(h.astype(bf), w3.astype(bf), preferred_element_type=jnp.float32)
    mu = jnp.tanh(mu + b3)
    return mu * action_scale + action_bias


if __name__ == "__main__":
    B, observation_dim, action_dim = 8, 16, 4
    u_max = jnp.array([1.0, 2.0, 0.5, 3.0], jnp.float32)
    u_min = jnp.array([-1.0, -2.0, -0.5, -1.0], jnp.float32)

    key = jax.random.PRNGKey(0)
    kx, kp = jax.random.split(key)
    params = init_params(kp, observation_dim, action_dim, u_max, u_min)
    x = jax.random.normal(kx, (B, observation_dim), jnp.float32)

    out = simple_actor_forward(x, params)
    out = jax.block_until_ready(out)
    assert out.shape == (B, action_dim)

    # Tight check against a reference using the identical bf16/f32 precision path.
    ref_bf16 = reference_forward_bf16(x, params)
    assert jnp.allclose(out, ref_bf16, atol=1e-3, rtol=1e-3)
    # Loose check against the pure f32 reference (bf16 weight quantization error).
    ref_f32 = reference_forward_f32(x, params)
    assert jnp.allclose(out, ref_f32, atol=5e-2, rtol=5e-2)

    # Also exercise the tiled path (B > block tile, non-multiple tail) once.
    B2 = 300
    x2 = jax.random.normal(jax.random.PRNGKey(1), (B2, observation_dim), jnp.float32)
    out2 = jax.block_until_ready(simple_actor_forward(x2, params))
    assert out2.shape == (B2, action_dim)
    assert jnp.allclose(out2, reference_forward_bf16(x2, params), atol=1e-3, rtol=1e-3)

    print("KERNEL_OK")
</pallas_src>

<mosaic_0001>
module attributes {stable_mosaic.version = 11 : i64} {
  func.func @actor_kernel(%arg0: i32, %arg1: memref<8x16xbf16, #tpu.memory_space<vmem>>, %arg2: memref<16x256xbf16, #tpu.memory_space<vmem>>, %arg3: memref<1x256xf32, #tpu.memory_space<vmem>>, %arg4: memref<256x256xbf16, #tpu.memory_space<vmem>>, %arg5: memref<1x256xf32, #tpu.memory_space<vmem>>, %arg6: memref<256x4xbf16, #tpu.memory_space<vmem>>, %arg7: memref<1x4xf32, #tpu.memory_space<vmem>>, %arg8: memref<1x4xf32, #tpu.memory_space<vmem>>, %arg9: memref<1x4xf32, #tpu.memory_space<vmem>>, %arg10: memref<8x4xf32, #tpu.memory_space<vmem>>) attributes {dimension_semantics = [#tpu.dimension_semantics<parallel>], iteration_bounds = array<i64: 1>, scalar_prefetch = 0 : i64, scratch_operands = 0 : i64, tpu.core_type = #tpu.core_type<tc>, window_params = [{transform_indices = @transform_0, window_bounds = array<i64: 8, 16>}, {pipeline_mode = #tpu.pipeline_mode<synchronous>, transform_indices = @transform_1, window_bounds = array<i64: 16, 256>}, {pipeline_mode = #tpu.pipeline_mode<synchronous>, transform_indices = @transform_2, window_bounds = array<i64: 1, 256>}, {pipeline_mode = #tpu.pipeline_mode<synchronous>, transform_indices = @transform_3, window_bounds = array<i64: 256, 256>}, {pipeline_mode = #tpu.pipeline_mode<synchronous>, transform_indices = @transform_4, window_bounds = array<i64: 1, 256>}, {pipeline_mode = #tpu.pipeline_mode<synchronous>, transform_indices = @transform_5, window_bounds = array<i64: 256, 4>}, {pipeline_mode = #tpu.pipeline_mode<synchronous>, transform_indices = @transform_6, window_bounds = array<i64: 1, 4>}, {pipeline_mode = #tpu.pipeline_mode<synchronous>, transform_indices = @transform_7, window_bounds = array<i64: 1, 4>}, {pipeline_mode = #tpu.pipeline_mode<synchronous>, transform_indices = @transform_8, window_bounds = array<i64: 1, 4>}, {transform_indices = @transform_9, window_bounds = array<i64: 8, 4>}]} {
    %c0 = arith.constant 0 : index
    %c0_0 = arith.constant 0 : index
    %0 = vector.load %arg1[%c0, %c0_0] : memref<8x16xbf16, #tpu.memory_space<vmem>>, vector<8x16xbf16>
    %c0_1 = arith.constant 0 : index
    %c0_2 = arith.constant 0 : index
    %1 = vector.load %arg2[%c0_1, %c0_2] : memref<16x256xbf16, #tpu.memory_space<vmem>>, vector<16x256xbf16>
    %cst = arith.constant dense<0.000000e+00> : vector<8x256xf32>
    %2 = tpu.matmul %0, %1, %cst {dimension_numbers = #tpu.dot_dimension_numbers<[1], [0], [0], [1], [0, 0, 1, 1], [], []>} : vector<8x16xbf16>, vector<16x256xbf16>, vector<8x256xf32> -> vector<8x256xf32>
    %c0_3 = arith.constant 0 : index
    %c0_4 = arith.constant 0 : index
    %3 = vector.load %arg3[%c0_3, %c0_4] : memref<1x256xf32, #tpu.memory_space<vmem>>, vector<1x256xf32>
    %4 = vector.broadcast %3 : vector<1x256xf32> to vector<8x256xf32>
    %5 = arith.addf %2, %4 : vector<8x256xf32>
    %cst_5 = arith.constant 0.000000e+00 : f32
    %6 = vector.broadcast %cst_5 : f32 to vector<8x256xf32>
    %7 = arith.maximumf %5, %6 : vector<8x256xf32>
    %8 = arith.truncf %7 : vector<8x256xf32> to vector<8x256xbf16>
    %c0_6 = arith.constant 0 : index
    %c0_7 = arith.constant 0 : index
    %9 = vector.load %arg4[%c0_6, %c0_7] : memref<256x256xbf16, #tpu.memory_space<vmem>>, vector<256x256xbf16>
    %cst_8 = arith.constant dense<0.000000e+00> : vector<8x256xf32>
    %10 = tpu.matmul %8, %9, %cst_8 {dimension_numbers = #tpu.dot_dimension_numbers<[1], [0], [0], [1], [0, 0, 1, 1], [], []>} : vector<8x256xbf16>, vector<256x256xbf16>, vector<8x256xf32> -> vector<8x256xf32>
    %c0_9 = arith.constant 0 : index
    %c0_10 = arith.constant 0 : index
    %11 = vector.load %arg5[%c0_9, %c0_10] : memref<1x256xf32, #tpu.memory_space<vmem>>, vector<1x256xf32>
    %12 = vector.broadcast %11 : vector<1x256xf32> to vector<8x256xf32>
    %13 = arith.addf %10, %12 : vector<8x256xf32>
    %cst_11 = arith.constant 0.000000e+00 : f32
    %14 = vector.broadcast %cst_11 : f32 to vector<8x256xf32>
    %15 = arith.maximumf %13, %14 : vector<8x256xf32>
    %16 = arith.truncf %15 : vector<8x256xf32> to vector<8x256xbf16>
    %c0_12 = arith.constant 0 : index
    %c0_13 = arith.constant 0 : index
    %17 = vector.load %arg6[%c0_12, %c0_13] : memref<256x4xbf16, #tpu.memory_space<vmem>>, vector<256x4xbf16>
    %cst_14 = arith.constant dense<0.000000e+00> : vector<8x4xf32>
    %18 = tpu.matmul %16, %17, %cst_14 {dimension_numbers = #tpu.dot_dimension_numbers<[1], [0], [0], [1], [0, 0, 1, 1], [], []>} : vector<8x256xbf16>, vector<256x4xbf16>, vector<8x4xf32> -> vector<8x4xf32>
    %c0_15 = arith.constant 0 : index
    %c0_16 = arith.constant 0 : index
    %19 = vector.load %arg7[%c0_15, %c0_16] : memref<1x4xf32, #tpu.memory_space<vmem>>, vector<1x4xf32>
    %20 = vector.broadcast %19 : vector<1x4xf32> to vector<8x4xf32>
    %21 = arith.addf %18, %20 : vector<8x4xf32>
    %22 = math.tanh %21 : vector<8x4xf32>
    %c0_17 = arith.constant 0 : index
    %c0_18 = arith.constant 0 : index
    %23 = vector.load %arg8[%c0_17, %c0_18] : memref<1x4xf32, #tpu.memory_space<vmem>>, vector<1x4xf32>
    %24 = vector.broadcast %23 : vector<1x4xf32> to vector<8x4xf32>
    %25 = arith.mulf %22, %24 : vector<8x4xf32>
    %c0_19 = arith.constant 0 : index
    %c0_20 = arith.constant 0 : index
    %26 = vector.load %arg9[%c0_19, %c0_20] : memref<1x4xf32, #tpu.memory_space<vmem>>, vector<1x4xf32>
    %27 = vector.broadcast %26 : vector<1x4xf32> to vector<8x4xf32>
    %28 = arith.addf %25, %27 : vector<8x4xf32>
    %c0_21 = arith.constant 0 : index
    %c0_22 = arith.constant 0 : index
    %29 = vector.load %arg10[%c0_21, %c0_22] : memref<8x4xf32, #tpu.memory_space<vmem>>, vector<8x4xf32>
    tpu.vector_store %arg10[%c0_21, %c0_22], %28 {strides = array<i32>} : memref<8x4xf32, #tpu.memory_space<vmem>>, vector<8x4xf32>,
    return
  }
  func.func @transform_0(%arg0: i32) -> (i32, i32) {
    %c0_i32 = arith.constant 0 : i32
    %c0_i32_0 = arith.constant 0 : i32
    return %arg0, %c0_i32 : i32, i32
  }
  func.func @transform_1(%arg0: i32) -> (i32, i32) {
    %c0_i32 = arith.constant 0 : i32
    %c0_i32_0 = arith.constant 0 : i32
    %c0_i32_1 = arith.constant 0 : i32
    return %c0_i32, %c0_i32_0 : i32, i32
  }
  func.func @transform_2(%arg0: i32) -> (i32, i32) {
    %c0_i32 = arith.constant 0 : i32
    %c0_i32_0 = arith.constant 0 : i32
    %c0_i32_1 = arith.constant 0 : i32
    return %c0_i32, %c0_i32_0 : i32, i32
  }
  func.func @transform_3(%arg0: i32) -> (i32, i32) {
    %c0_i32 = arith.constant 0 : i32
    %c0_i32_0 = arith.constant 0 : i32
    %c0_i32_1 = arith.constant 0 : i32
    return %c0_i32, %c0_i32_0 : i32, i32
  }
  func.func @transform_4(%arg0: i32) -> (i32, i32) {
    %c0_i32 = arith.constant 0 : i32
    %c0_i32_0 = arith.constant 0 : i32
    %c0_i32_1 = arith.constant 0 : i32
    return %c0_i32, %c0_i32_0 : i32, i32
  }
  func.func @transform_5(%arg0: i32) -> (i32, i32) {
    %c0_i32 = arith.constant 0 : i32
    %c0_i32_0 = arith.constant 0 : i32
    %c0_i32_1 = arith.constant 0 : i32
    return %c0_i32, %c0_i32_0 : i32, i32
  }
  func.func @transform_6(%arg0: i32) -> (i32, i32) {
    %c0_i32 = arith.constant 0 : i32
    %c0_i32_0 = arith.constant 0 : i32
    %c0_i32_1 = arith.constant 0 : i32
    return %c0_i32, %c0_i32_0 : i32, i32
  }
  func.func @transform_7(%arg0: i32) -> (i32, i32) {
    %c0_i32 = arith.constant 0 : i32
    %c0_i32_0 = arith.constant 0 : i32
    %c0_i32_1 = arith.constant 0 : i32
    return %c0_i32, %c0_i32_0 : i32, i32
  }
  func.func @transform_8(%arg0: i32) -> (i32, i32) {
    %c0_i32 = arith.constant 0 : i32
    %c0_i32_0 = arith.constant 0 : i32
    %c0_i32_1 = arith.constant 0 : i32
    return %c0_i32, %c0_i32_0 : i32, i32
  }
  func.func @transform_9(%arg0: i32) -> (i32, i32) {
    %c0_i32 = arith.constant 0 : i32
    %c0_i32_0 = arith.constant 0 : i32
    return %arg0, %c0_i32 : i32, i32
  }
}

</mosaic_0001>

<llo_original>
// kernel: simple_actor_forward.1
$region0: #{simple_actor_forward.1}
  #allocation0 [shape = 'u32[]', space=smem, size = 0x4, offset = 0x4, fixed_abs, tag = 'smem constant byte address 0x4 - core index']
  #allocation1 [shape = 'u32[144,128]{1,0:T(1,128)}', space=vmem, size = 0x12000, scoped, tag = 'internal scratch']
  %s0 = inlined_call_operand.vmem [shape: bf16[8,16], index: 0, kind: input, shape index: {}]
  %s1 = inlined_call_operand.vmem [shape: bf16[16,256], index: 1, kind: input, shape index: {}]
  %s2 = inlined_call_operand.vmem [shape: f32[1,256], index: 2, kind: input, shape index: {}]
  %s3 = inlined_call_operand.vmem [shape: bf16[256,256], index: 3, kind: input, shape index: {}]
  %s4 = inlined_call_operand.vmem [shape: f32[1,256], index: 4, kind: input, shape index: {}]
  %s5 = inlined_call_operand.vmem [shape: bf16[256,4], index: 5, kind: input, shape index: {}]
  %s6 = inlined_call_operand.vmem [shape: f32[1,4], index: 6, kind: input, shape index: {}]
  %s7 = inlined_call_operand.vmem [shape: f32[1,4], index: 7, kind: input, shape index: {}]
  %s8 = inlined_call_operand.vmem [shape: f32[1,4], index: 8, kind: input, shape index: {}]
  %s9 = inlined_call_operand.vmem [shape: f32[8,4], index: 9, kind: output, shape index: {}]
  %s10 = sld [smem:[#allocation0]]
  $region46: #{simple_actor_forward.1} parent=0
    _
  %s12 = ssub.s32 1, %s10
  %s13 = scalar_select 0, %s12, %s10
  // Predicated region
  $region2: #{simple_actor_forward.1} parent=0 // pred_check
    _
  $region3: #{simple_actor_forward.1} parent=0 // pred_check_branch
    %15 = sbr.rel (0) target = $region5
  $region4: #{simple_actor_forward.1} parent=0 // pred_region
    _
  $region5: #{simple_actor_forward.1} parent=0 // pred_fallthru
    _
  // Predicated region
  $region6: #{simple_actor_forward.1} parent=0 // pred_check
    _
  $region7: #{simple_actor_forward.1} parent=0 // pred_check_branch
    %17 = sbr.rel (0) target = $region9
  $region8: #{simple_actor_forward.1} parent=0 // pred_region
    _
  $region9: #{simple_actor_forward.1} parent=0 // pred_fallthru
    _
  // Predicated region
  $region10: #{simple_actor_forward.1} parent=0 // pred_check
    _
  $region11: #{simple_actor_forward.1} parent=0 // pred_check_branch
    %19 = sbr.rel (0) target = $region13
  $region12: #{simple_actor_forward.1} parent=0 // pred_region
    _
  $region13: #{simple_actor_forward.1} parent=0 // pred_fallthru
    _
  // Predicated region
  $region14: #{simple_actor_forward.1} parent=0 // pred_check
    _
  $region15: #{simple_actor_forward.1} parent=0 // pred_check_branch
    %21 = sbr.rel (0) target = $region17
  $region16: #{simple_actor_forward.1} parent=0 // pred_region
    _
  $region17: #{simple_actor_forward.1} parent=0 // pred_fallthru
    _
  // Predicated region
  $region18: #{simple_actor_forward.1} parent=0 // pred_check
    _
  $region19: #{simple_actor_forward.1} parent=0 // pred_check_branch
    %23 = sbr.rel (0) target = $region21
  $region20: #{simple_actor_forward.1} parent=0 // pred_region
    _
  $region21: #{simple_actor_forward.1} parent=0 // pred_fallthru
    _
  // Predicated region
  $region22: #{simple_actor_forward.1} parent=0 // pred_check
    _
  $region23: #{simple_actor_forward.1} parent=0 // pred_check_branch
    %25 = sbr.rel (0) target = $region25
  $region24: #{simple_actor_forward.1} parent=0 // pred_region
    _
  $region25: #{simple_actor_forward.1} parent=0 // pred_fallthru
    _
  // Predicated region
  $region26: #{simple_actor_forward.1} parent=0 // pred_check
    _
  $region27: #{simple_actor_forward.1} parent=0 // pred_check_branch
    %27 = sbr.rel (0) target = $region29
  $region28: #{simple_actor_forward.1} parent=0 // pred_region
    _
  $region29: #{simple_actor_forward.1} parent=0 // pred_fallthru
    _
  // Predicated region
  $region30: #{simple_actor_forward.1} parent=0 // pred_check
    _
  $region31: #{simple_actor_forward.1} parent=0 // pred_check_branch
    %29 = sbr.rel (0) target = $region33
  $region32: #{simple_actor_forward.1} parent=0 // pred_region
    _
  $region33: #{simple_actor_forward.1} parent=0 // pred_fallthru
    _
  // Predicated region
  $region34: #{simple_actor_forward.1} parent=0 // pred_check
    _
  $region35: #{simple_actor_forward.1} parent=0 // pred_check_branch
    %31 = sbr.rel (0) target = $region37
  $region36: #{simple_actor_forward.1} parent=0 // pred_region
    _
  $region37: #{simple_actor_forward.1} parent=0 // pred_fallthru
    _
  %v33 = vld [vmem:[%s0] sm:$0xf]
  %v34 = vld [vmem:[%s1] sm:$0xff]
  %v35 = vld [vmem:[%s1 + $0x8] sm:$0xff]
  %v36 = vld [vmem:[%s2] sm:$0x3]
  %v38 = vlaneseq
  %v39 = vshrl.u32 %v38, 7
  %v40 = vsub.s32 0, %v39
  %v41 = vrot.slane %v36, %v40
  %v42 = vlaneseq
  %v43 = vshrl.u32 %v42, 7
  %v44 = vsub.s32 1, %v43
  %v45 = vrot.slane %v36, %v44
  %v50 = vunpack.c.l.b16 %v34
  %v51 = vunpack.c.h.b16 %v34
  %v52 = vunpack.c.l.b16 %v35
  %v53 = vunpack.c.h.b16 %v35
  %v54 = vpack.c.b16 %v52, %v50
  %v55 = vpack.c.b16 %v53, %v51
  %vm58 = vcmask 130048
  %v60 = vsel %vm58, %v33, 0
  %62 = vmatprep.subr.bf16.mxu0 %v55
  %63 = vmatpush1.bf16.msra.mxu0 %v54
  %64 = vmatprep.subr.bf16.mxu0 0
  %65 = vmatpush1.bf16.msra.mxu0 0
  %66 = vmatprep.subr.bf16.mxu0 0
  %67 = vmatpush1.bf16.msra.mxu0 0
  %68 = vmatprep.subr.bf16.mxu0 0
  %69 = vmatpush1.bf16.msra.mxu0 0
  %70 = vmatprep.subr.bf16.mxu0 0
  %71 = vmatpush1.bf16.msra.mxu0 0
  %72 = vmatprep.subr.bf16.mxu0 0
  %73 = vmatpush1.bf16.msra.mxu0 0
  %74 = vmatprep.subr.bf16.mxu0 0
  %75 = vmatpush1.bf16.msra.mxu0 0
  %76 = vmatprep.subr.bf16.mxu0 0
  %77 = vmatpush1.bf16.msra.mxu0 0
  %78 = vmatprep.subr.bf16.mxu0 0
  %79 = vmatpush1.bf16.msra.mxu0 0
  %80 = vmatprep.subr.bf16.mxu0 0
  %81 = vmatpush1.bf16.msra.mxu0 0
  %82 = vmatprep.subr.bf16.mxu0 0
  %83 = vmatpush1.bf16.msra.mxu0 0
  %84 = vmatprep.subr.bf16.mxu0 0
  %85 = vmatpush1.bf16.msra.mxu0 0
  %86 = vmatprep.subr.bf16.mxu0 0
  %87 = vmatpush1.bf16.msra.mxu0 0
  %88 = vmatprep.subr.bf16.mxu0 0
  %89 = vmatpush1.bf16.msra.mxu0 0
  %90 = vmatprep.subr.bf16.mxu0 0
  %91 = vmatpush1.bf16.msra.mxu0 0
  %92 = vmatprep.subr.bf16.mxu0 0
  %93 = vmatpush1.bf16.msra.mxu0 0
  %94 = vmatprep.mubr.bf16.mxu0 0
  %95 = vmatmul.mubr.bf16.gmra.mrb[0].mxu0 %v60
  %v96 = vpop.f32.mrb[0].mxu0
  %v97 = vadd.f32 %v41, %v96
  %v98 = vpop.f32.mrb[0].mxu0
  %v99 = vadd.f32 %v45, %v98
  %v100 = vpop.f32.mrb[0].mxu0
  %v101 = vpop.f32.mrb[0].mxu0
  %102 = vdwg.mxu0
  %v103 = vmax.f32 %v97, 0.0
  %v104 = vmax.f32 %v99, 0.0
  %v105 = vpack.c.bf16 %v103, %v103
  %v106 = vpack.c.bf16 %v104, %v104
  %v107 = vld [vmem:[%s3] sm:$0xff]
  %v108 = vld [vmem:[%s3 + $0x8] sm:$0xff]
  %v109 = vld [vmem:[%s3 + $0x10] sm:$0xff]
  %v110 = vld [vmem:[%s3 + $0x18] sm:$0xff]
  %v111 = vld [vmem:[%s3 + $0x20] sm:$0xff]
  %v112 = vld [vmem:[%s3 + $0x28] sm:$0xff]
  %v113 = vld [vmem:[%s3 + $0x30] sm:$0xff]
  %v114 = vld [vmem:[%s3 + $0x38] sm:$0xff]
  %v115 = vld [vmem:[%s3 + $0x40] sm:$0xff]
  %v116 = vld [vmem:[%s3 + $0x48] sm:$0xff]
  %v117 = vld [vmem:[%s3 + $0x50] sm:$0xff]
  %v118 = vld [vmem:[%s3 + $0x58] sm:$0xff]
  %v119 = vld [vmem:[%s3 + $0x60] sm:$0xff]
  %v120 = vld [vmem:[%s3 + $0x68] sm:$0xff]
  %v121 = vld [vmem:[%s3 + $0x70] sm:$0xff]
  %v122 = vld [vmem:[%s3 + $0x78] sm:$0xff]
  %v123 = vld [vmem:[%s3 + $0x80] sm:$0xff]
  %v124 = vld [vmem:[%s3 + $0x88] sm:$0xff]
  %v125 = vld [vmem:[%s3 + $0x90] sm:$0xff]
  %v126 = vld [vmem:[%s3 + $0x98] sm:$0xff]
  %v127 = vld [vmem:[%s3 + $0xa0] sm:$0xff]
  %v128 = vld [vmem:[%s3 + $0xa8] sm:$0xff]
  %v129 = vld [vmem:[%s3 + $0xb0] sm:$0xff]
  %v130 = vld [vmem:[%s3 + $0xb8] sm:$0xff]
  %v131 = vld [vmem:[%s3 + $0xc0] sm:$0xff]
  %v132 = vld [vmem:[%s3 + $0xc8] sm:$0xff]
  %v133 = vld [vmem:[%s3 + $0xd0] sm:$0xff]
  %v134 = vld [vmem:[%s3 + $0xd8] sm:$0xff]
  %v135 = vld [vmem:[%s3 + $0xe0] sm:$0xff]
  %v136 = vld [vmem:[%s3 + $0xe8] sm:$0xff]
  %v137 = vld [vmem:[%s3 + $0xf0] sm:$0xff]
  %v138 = vld [vmem:[%s3 + $0xf8] sm:$0xff]
  %v139 = vld [vmem:[%s4] sm:$0x3]
  %v141 = vlaneseq
  %v142 = vshrl.u32 %v141, 7
  %v143 = vsub.s32 0, %v142
  %v144 = vrot.slane %v139, %v143
  %v145 = vlaneseq
  %v146 = vshrl.u32 %v145, 7
  %v147 = vsub.s32 1, %v146
  %v148 = vrot.slane %v139, %v147
  %v183 = vunpack.c.l.b16 %v107
  %v184 = vunpack.c.h.b16 %v107
  %v185 = vunpack.c.l.b16 %v108
  %v186 = vunpack.c.h.b16 %v108
  %v187 = vunpack.c.l.b16 %v109
  %v188 = vunpack.c.h.b16 %v109
  %v189 = vunpack.c.l.b16 %v110
  %v190 = vunpack.c.h.b16 %v110
  %v191 = vunpack.c.l.b16 %v111
  %v192 = vunpack.c.h.b16 %v111
  %v193 = vunpack.c.l.b16 %v112
  %v194 = vunpack.c.h.b16 %v112
  %v195 = vunpack.c.l.b16 %v113
  %v196 = vunpack.c.h.b16 %v113
  %v197 = vunpack.c.l.b16 %v114
  %v198 = vunpack.c.h.b16 %v114
  %v199 = vunpack.c.l.b16 %v115
  %v200 = vunpack.c.h.b16 %v115
  %v201 = vunpack.c.l.b16 %v116
  %v202 = vunpack.c.h.b16 %v116
  %v203 = vunpack.c.l.b16 %v117
  %v204 = vunpack.c.h.b16 %v117
  %v205 = vunpack.c.l.b16 %v118
  %v206 = vunpack.c.h.b16 %v118
  %v207 = vunpack.c.l.b16 %v119
  %v208 = vunpack.c.h.b16 %v119
  %v209 = vunpack.c.l.b16 %v120
  %v210 = vunpack.c.h.b16 %v120
  %v211 = vunpack.c.l.b16 %v121
  %v212 = vunpack.c.h.b16 %v121
  %v213 = vunpack.c.l.b16 %v122
  %v214 = vunpack.c.h.b16 %v122
  %v215 = vunpack.c.l.b16 %v123
  %v216 = vunpack.c.h.b16 %v123
  %v217 = vunpack.c.l.b16 %v124
  %v218 = vunpack.c.h.b16 %v124
  %v219 = vunpack.c.l.b16 %v125
  %v220 = vunpack.c.h.b16 %v125
  %v221 = vunpack.c.l.b16 %v126
  %v222 = vunpack.c.h.b16 %v126
  %v223 = vunpack.c.l.b16 %v127
  %v224 = vunpack.c.h.b16 %v127
  %v225 = vunpack.c.l.b16 %v128
  %v226 = vunpack.c.h.b16 %v128
  %v227 = vunpack.c.l.b16 %v129
  %v228 = vunpack.c.h.b16 %v129
  %v229 = vunpack.c.l.b16 %v130
  %v230 = vunpack.c.h.b16 %v130
  %v231 = vunpack.c.l.b16 %v131
  %v232 = vunpack.c.h.b16 %v131
  %v233 = vunpack.c.l.b16 %v132
  %v234 = vunpack.c.h.b16 %v132
  %v235 = vunpack.c.l.b16 %v133
  %v236 = vunpack.c.h.b16 %v133
  %v237 = vunpack.c.l.b16 %v134
  %v238 = vunpack.c.h.b16 %v134
  %v239 = vunpack.c.l.b16 %v135
  %v240 = vunpack.c.h.b16 %v135
  %v241 = vunpack.c.l.b16 %v136
  %v242 = vunpack.c.h.b16 %v136
  %v243 = vunpack.c.l.b16 %v137
  %v244 = vunpack.c.h.b16 %v137
  %v245 = vunpack.c.l.b16 %v138
  %v246 = vunpack.c.h.b16 %v138
  %v247 = vpack.c.b16 %v185, %v183
  %v248 = vpack.c.b16 %v186, %v184
  %v249 = vpack.c.b16 %v189, %v187
  %v250 = vpack.c.b16 %v190, %v188
  %v251 = vpack.c.b16 %v193, %v191
  %v252 = vpack.c.b16 %v194, %v192
  %v253 = vpack.c.b16 %v197, %v195
  %v254 = vpack.c.b16 %v198, %v196
  %v255 = vpack.c.b16 %v201, %v199
  %v256 = vpack.c.b16 %v202, %v200
  %v257 = vpack.c.b16 %v205, %v203
  %v258 = vpack.c.b16 %v206, %v204
  %v259 = vpack.c.b16 %v209, %v207
  %v260 = vpack.c.b16 %v210, %v208
  %v261 = vpack.c.b16 %v213, %v211
  %v262 = vpack.c.b16 %v214, %v212
  %v263 = vpack.c.b16 %v217, %v215
  %v264 = vpack.c.b16 %v218, %v216
  %v265 = vpack.c.b16 %v221, %v219
  %v266 = vpack.c.b16 %v222, %v220
  %v267 = vpack.c.b16 %v225, %v223
  %v268 = vpack.c.b16 %v226, %v224
  %v269 = vpack.c.b16 %v229, %v227
  %v270 = vpack.c.b16 %v230, %v228
  %v271 = vpack.c.b16 %v233, %v231
  %v272 = vpack.c.b16 %v234, %v232
  %v273 = vpack.c.b16 %v237, %v235
  %v274 = vpack.c.b16 %v238, %v236
  %v275 = vpack.c.b16 %v241, %v239
  %v276 = vpack.c.b16 %v242, %v240
  %v277 = vpack.c.b16 %v245, %v243
  %v278 = vpack.c.b16 %v246, %v244
  %311 = vmatprep.subr.bf16.mxu0 %v248
  %312 = vmatpush1.bf16.msra.mxu0 %v247
  %313 = vmatprep.subr.bf16.mxu0 %v250
  %314 = vmatpush1.bf16.msra.mxu0 %v249
  %315 = vmatprep.subr.bf16.mxu0 %v252
  %316 = vmatpush1.bf16.msra.mxu0 %v251
  %317 = vmatprep.subr.bf16.mxu0 %v254
  %318 = vmatpush1.bf16.msra.mxu0 %v253
  %319 = vmatprep.subr.bf16.mxu0 %v256
  %320 = vmatpush1.bf16.msra.mxu0 %v255
  %321 = vmatprep.subr.bf16.mxu0 %v258
  %322 = vmatpush1.bf16.msra.mxu0 %v257
  %323 = vmatprep.subr.bf16.mxu0 %v260
  %324 = vmatpush1.bf16.msra.mxu0 %v259
  %325 = vmatprep.subr.bf16.mxu0 %v262
  %326 = vmatpush1.bf16.msra.mxu0 %v261
  %327 = vmatprep.subr.bf16.mxu0 %v264
  %328 = vmatpush1.bf16.msra.mxu0 %v263
  %329 = vmatprep.subr.bf16.mxu0 %v266
  %330 = vmatpush1.bf16.msra.mxu0 %v265
  %331 = vmatprep.subr.bf16.mxu0 %v268
  %332 = vmatpush1.bf16.msra.mxu0 %v267
  %333 = vmatprep.subr.bf16.mxu0 %v270
  %334 = vmatpush1.bf16.msra.mxu0 %v269
  %335 = vmatprep.subr.bf16.mxu0 %v272
  %336 = vmatpush1.bf16.msra.mxu0 %v271
  %337 = vmatprep.subr.bf16.mxu0 %v274
  %338 = vmatpush1.bf16.msra.mxu0 %v273
  %339 = vmatprep.subr.bf16.mxu0 %v276
  %340 = vmatpush1.bf16.msra.mxu0 %v275
  %341 = vmatprep.subr.bf16.mxu0 %v278
  %342 = vmatpush1.bf16.msra.mxu0 %v277
  %343 = vmatprep.mubr.bf16.mxu0 %v106
  %344 = vmatmul.mubr.bf16.gmra.mrb[0].mxu0 %v105
  %v345 = vpop.f32.mrb[0].mxu0
  %v346 = vadd.f32 %v144, %v345
  %v347 = vpop.f32.mrb[0].mxu0
  %v348 = vadd.f32 %v148, %v347
  %v349 = vpop.f32.mrb[0].mxu0
  %v350 = vpop.f32.mrb[0].mxu0
  %351 = vdwg.mxu0
  %v352 = vmax.f32 %v346, 0.0
  %v353 = vmax.f32 %v348, 0.0
  %v354 = vpack.c.bf16 %v352, %v352
  %v355 = vpack.c.bf16 %v353, %v353
  %v356 = vld [vmem:[%s5] sm:$0xf]
  %v357 = vld [vmem:[%s5 + $0x4] sm:$0xf]
  %v358 = vld [vmem:[%s5 + $0x8] sm:$0xf]
  %v359 = vld [vmem:[%s5 + $0xc] sm:$0xf]
  %v360 = vld [vmem:[%s5 + $0x10] sm:$0xf]
  %v361 = vld [vmem:[%s5 + $0x14] sm:$0xf]
  %v362 = vld [vmem:[%s5 + $0x18] sm:$0xf]
  %v363 = vld [vmem:[%s5 + $0x1c] sm:$0xf]
  %v364 = vld [vmem:[%s5 + $0x20] sm:$0xf]
  %v365 = vld [vmem:[%s5 + $0x24] sm:$0xf]
  %v366 = vld [vmem:[%s5 + $0x28] sm:$0xf]
  %v367 = vld [vmem:[%s5 + $0x2c] sm:$0xf]
  %v368 = vld [vmem:[%s5 + $0x30] sm:$0xf]
  %v369 = vld [vmem:[%s5 + $0x34] sm:$0xf]
  %v370 = vld [vmem:[%s5 + $0x38] sm:$0xf]
  %v371 = vld [vmem:[%s5 + $0x3c] sm:$0xf]
  %v372 = vld [vmem:[%s5 + $0x40] sm:$0xf]
  %v373 = vld [vmem:[%s5 + $0x44] sm:$0xf]
  %v374 = vld [vmem:[%s5 + $0x48] sm:$0xf]
  %v375 = vld [vmem:[%s5 + $0x4c] sm:$0xf]
  %v376 = vld [vmem:[%s5 + $0x50] sm:$0xf]
  %v377 = vld [vmem:[%s5 + $0x54] sm:$0xf]
  %v378 = vld [vmem:[%s5 + $0x58] sm:$0xf]
  %v379 = vld [vmem:[%s5 + $0x5c] sm:$0xf]
  %v380 = vld [vmem:[%s5 + $0x60] sm:$0xf]
  %v381 = vld [vmem:[%s5 + $0x64] sm:$0xf]
  %v382 = vld [vmem:[%s5 + $0x68] sm:$0xf]
  %v383 = vld [vmem:[%s5 + $0x6c] sm:$0xf]
  %v384 = vld [vmem:[%s5 + $0x70] sm:$0xf]
  %v385 = vld [vmem:[%s5 + $0x74] sm:$0xf]
  %v386 = vld [vmem:[%s5 + $0x78] sm:$0xf]
  %v387 = vld [vmem:[%s5 + $0x7c] sm:$0xf]
  %v388 = vld [vmem:[%s6] sm:$0x1]
  %v390 = vlaneseq
  %v391 = vshrl.u32 %v390, 7
  %v392 = vsub.s32 0, %v391
  %v393 = vrot.slane %v388, %v392
  %v427 = vunpack.c.l.b16 %v356
  %v428 = vunpack.c.l.b16 %v357
  %v429 = vunpack.c.l.b16 %v358
  %v430 = vunpack.c.l.b16 %v359
  %v431 = vunpack.c.l.b16 %v360
  %v432 = vunpack.c.l.b16 %v361
  %v433 = vunpack.c.l.b16 %v362
  %v434 = vunpack.c.l.b16 %v363
  %v435 = vunpack.c.l.b16 %v364
  %v436 = vunpack.c.l.b16 %v365
  %v437 = vunpack.c.l.b16 %v366
  %v438 = vunpack.c.l.b16 %v367
  %v439 = vunpack.c.l.b16 %v368
  %v440 = vunpack.c.l.b16 %v369
  %v441 = vunpack.c.l.b16 %v370
  %v442 = vunpack.c.l.b16 %v371
  %v443 = vunpack.c.l.b16 %v372
  %v444 = vunpack.c.l.b16 %v373
  %v445 = vunpack.c.l.b16 %v374
  %v446 = vunpack.c.l.b16 %v375
  %v447 = vunpack.c.l.b16 %v376
  %v448 = vunpack.c.l.b16 %v377
  %v449 = vunpack.c.l.b16 %v378
  %v450 = vunpack.c.l.b16 %v379
  %v451 = vunpack.c.l.b16 %v380
  %v452 = vunpack.c.l.b16 %v381
  %v453 = vunpack.c.l.b16 %v382
  %v454 = vunpack.c.l.b16 %v383
  %v455 = vunpack.c.l.b16 %v384
  %v456 = vunpack.c.l.b16 %v385
  %v457 = vunpack.c.l.b16 %v386
  %v458 = vunpack.c.l.b16 %v387
  %v459 = vpack.c.b16 %v428, %v427
  %v460 = vpack.c.b16 %v430, %v429
  %v461 = vpack.c.b16 %v432, %v431
  %v462 = vpack.c.b16 %v434, %v433
  %v463 = vpack.c.b16 %v436, %v435
  %v464 = vpack.c.b16 %v438, %v437
  %v465 = vpack.c.b16 %v440, %v439
  %v466 = vpack.c.b16 %v442, %v441
  %v467 = vpack.c.b16 %v444, %v443
  %v468 = vpack.c.b16 %v446, %v445
  %v469 = vpack.c.b16 %v448, %v447
  %v470 = vpack.c.b16 %v450, %v449
  %v471 = vpack.c.b16 %v452, %v451
  %v472 = vpack.c.b16 %v454, %v453
  %v473 = vpack.c.b16 %v456, %v455
  %v474 = vpack.c.b16 %v458, %v457
  %491 = vmatprep.subr.bf16.mxu0 0
  %492 = vmatpush1.bf16.msra.mxu0 %v459
  %493 = vmatprep.subr.bf16.mxu0 0
  %494 = vmatpush1.bf16.msra.mxu0 %v460
  %495 = vmatprep.subr.bf16.mxu0 0
  %496 = vmatpush1.bf16.msra.mxu0 %v461
  %497 = vmatprep.subr.bf16.mxu0 0
  %498 = vmatpush1.bf16.msra.mxu0 %v462
  %499 = vmatprep.subr.bf16.mxu0 0
  %500 = vmatpush1.bf16.msra.mxu0 %v463
  %501 = vmatprep.subr.bf16.mxu0 0
  %502 = vmatpush1.bf16.msra.mxu0 %v464
  %503 = vmatprep.subr.bf16.mxu0 0
  %504 = vmatpush1.bf16.msra.mxu0 %v465
  %505 = vmatprep.subr.bf16.mxu0 0
  %506 = vmatpush1.bf16.msra.mxu0 %v466
  %507 = vmatprep.subr.bf16.mxu0 0
  %508 = vmatpush1.bf16.msra.mxu0 %v467
  %509 = vmatprep.subr.bf16.mxu0 0
  %510 = vmatpush1.bf16.msra.mxu0 %v468
  %511 = vmatprep.subr.bf16.mxu0 0
  %512 = vmatpush1.bf16.msra.mxu0 %v469
  %513 = vmatprep.subr.bf16.mxu0 0
  %514 = vmatpush1.bf16.msra.mxu0 %v470
  %515 = vmatprep.subr.bf16.mxu0 0
  %516 = vmatpush1.bf16.msra.mxu0 %v471
  %517 = vmatprep.subr.bf16.mxu0 0
  %518 = vmatpush1.bf16.msra.mxu0 %v472
  %519 = vmatprep.subr.bf16.mxu0 0
  %520 = vmatpush1.bf16.msra.mxu0 %v473
  %521 = vmatprep.subr.bf16.mxu0 0
  %522 = vmatpush1.bf16.msra.mxu0 %v474
  %523 = vmatprep.mubr.bf16.mxu0 %v355
  %524 = vmatmul.mubr.bf16.gmra.mrb[0].mxu0 %v354
  %v525 = vpop.f32.mrb[0].mxu0
  %v526 = vadd.f32 %v393, %v525
  %v527 = vpop.f32.mrb[0].mxu0
  %v528 = vpop.f32.mrb[0].mxu0
  %v529 = vpop.f32.mrb[0].mxu0
  %530 = vdwg.mxu0
  %v531 = vtanh.pop %v526
  %v532 = vld [vmem:[%s7] sm:$0x1]
  %v534 = vlaneseq
  %v535 = vshrl.u32 %v534, 7
  %v536 = vsub.s32 0, %v535
  %v537 = vrot.slane %v532, %v536
  %v539 = vmul.f32 %v531, %v537
  %v540 = vld [vmem:[%s8] sm:$0x1]
  %v542 = vlaneseq
  %v543 = vshrl.u32 %v542, 7
  %v544 = vsub.s32 0, %v543
  %v545 = vrot.slane %v540, %v544
  %v547 = vadd.f32 %v539, %v545
  %vm548 = vcmask 31744
  %549 = vst.msk [vmem:[%s9] sm:$0xff] %vm548, %v547
  // Predicated region
  $region38: #{simple_actor_forward.1} parent=0 // pred_check
    _
  $region39: #{simple_actor_forward.1} parent=0 // pred_check_branch
    %551 = sbr.rel (0) target = $region41
  $region40: #{simple_actor_forward.1} parent=0 // pred_region
    _
  $region41: #{simple_actor_forward.1} parent=0 // pred_fallthru
    _
  // Predicated region
  $region42: #{simple_actor_forward.1} parent=0 // pred_check
    _
  $region43: #{simple_actor_forward.1} parent=0 // pred_check_branch
    %553 = sbr.rel (0) target = $region45
  $region44: #{simple_actor_forward.1} parent=0 // pred_region
    _
  $region45: #{simple_actor_forward.1} parent=0 // pred_fallthru
    _

</llo_original>
